<compile_context>
chip_gen: v5e
topology: v5e:2x2
jax: 0.10.0
libtpu: 0.0.40
codegen_flags: <defaults>
</compile_context>

<pallas_src>
import jax
import jax.numpy as jnp
from jax.experimental import pallas as pl
from jax.experimental.pallas import tpu as pltpu

IN_DIM = 10
HID_DIM = 300
HID_PAD = 384   # 3 * 128 -> lane-dense hidden vregs
OUT_DIM = 1
LANE = 128


def _round_up(x, m):
    return ((x + m - 1) // m) * m


def _mlp_kernel(xt_ref, w0_ref, b0_ref, w1_ref, b1_ref, o_ref):
    # xt: (IN_DIM, TM)  w0: (HID_PAD, IN_DIM)  b0: (HID_PAD, 1)
    # w1: (HID_PAD, 1)  b1: (1, 1) in SMEM     o: (1, TM)
    # lin0 (transposed): (HID_PAD, IN_DIM) @ (IN_DIM, TM) -> (HID_PAD, TM) on MXU
    h = jnp.dot(w0_ref[...], xt_ref[...], preferred_element_type=jnp.float32)
    h = jnp.maximum(h + b0_ref[...], 0.0)          # bias + ReLU (VPU)
    # dropout (eval mode) = identity
    # lin1 (N=1): VPU multiply + reduction over the hidden (sublane) axis
    y = jnp.sum(h * w1_ref[...], axis=0, keepdims=True) + b1_ref[0, 0]   # (1, TM)
    o_ref[...] = y.astype(o_ref.dtype)


def mlp_forward(x, w0, b0, w1, b1, *, tm=512):
    """x: (B, 10); w0: (300, 10); b0: (300,); w1: (1, 300); b1: (1,) (PyTorch layout)."""
    B = x.shape[0]

    # ---- one-time host-side layout plumbing (pads / transposes) ----
    b_pad = _round_up(max(B, LANE), LANE)
    tm = min(tm, b_pad)
    b_pad = _round_up(b_pad, tm)

    xt = jnp.pad(x.astype(jnp.float32).T, ((0, 0), (0, b_pad - B)))            # (10, B_pad)
    w0p = jnp.pad(w0.astype(jnp.float32), ((0, HID_PAD - HID_DIM), (0, 0)))    # (384, 10)
    b0p = jnp.pad(b0.astype(jnp.float32).reshape(HID_DIM, 1),
                  ((0, HID_PAD - HID_DIM), (0, 0)))                            # (384, 1)
    w1p = jnp.pad(w1.astype(jnp.float32).reshape(HID_DIM, 1),
                  ((0, HID_PAD - HID_DIM), (0, 0)))                            # (384, 1)
    b1p = b1.astype(jnp.float32).reshape(1, 1)                                 # (1, 1)

    grid = (b_pad // tm,)
    yt = pl.pallas_call(
        _mlp_kernel,
        out_shape=jax.ShapeDtypeStruct((1, b_pad), jnp.float32),
        grid=grid,
        in_specs=[
            pl.BlockSpec((IN_DIM, tm), lambda i: (0, i)),        # x tile (streamed)
            pl.BlockSpec((HID_PAD, IN_DIM), lambda i: (0, 0)),   # weights: resident
            pl.BlockSpec((HID_PAD, 1), lambda i: (0, 0)),        # b0: resident
            pl.BlockSpec((HID_PAD, 1), lambda i: (0, 0)),        # w1 column: resident
            pl.BlockSpec(memory_space=pltpu.MemorySpace.SMEM),   # b1 scalar in SMEM
        ],
        out_specs=pl.BlockSpec((1, tm), lambda i: (0, i)),       # lane-dense output
        compiler_params=pltpu.CompilerParams(
            dimension_semantics=("parallel",),
        ),
    )(xt, w0p, b0p, w1p, b1p)

    return yt.reshape(b_pad, 1)[:B].astype(x.dtype)


def init_params(key):
    """nn.Linear-style init (uniform +-1/sqrt(fan_in)), PyTorch (out, in) layout."""
    k0, k1, k2, k3 = jax.random.split(key, 4)
    lim0 = 1.0 / jnp.sqrt(IN_DIM)
    lim1 = 1.0 / jnp.sqrt(HID_DIM)
    w0 = jax.random.uniform(k0, (HID_DIM, IN_DIM), jnp.float32, -lim0, lim0)
    b0 = jax.random.uniform(k1, (HID_DIM,), jnp.float32, -lim0, lim0)
    w1 = jax.random.uniform(k2, (OUT_DIM, HID_DIM), jnp.float32, -lim1, lim1)
    b1 = jax.random.uniform(k3, (OUT_DIM,), jnp.float32, -lim1, lim1)
    return w0, b0, w1, b1


if __name__ == "__main__":
    key = jax.random.PRNGKey(0)
    kx, kp = jax.random.split(key)
    B = 8
    x = jax.random.normal(kx, (B, IN_DIM), jnp.float32)
    w0, b0, w1, b1 = init_params(kp)

    out = mlp_forward(x, w0, b0, w1, b1)
    out = jax.block_until_ready(out)

    # plain-JAX reference (eval-mode dropout = identity)
    ref = jnp.maximum(x @ w0.T + b0, 0.0) @ w1.T + b1
    assert out.shape == (B, OUT_DIM)
    assert jnp.allclose(out, ref, atol=1e-5, rtol=1e-5)

    print("KERNEL_OK")
</pallas_src>

<mosaic_0001>
module attributes {stable_mosaic.version = 11 : i64} {
  func.func @_mlp_kernel(%arg0: i32, %arg1: memref<10x128xf32, #tpu.memory_space<vmem>>, %arg2: memref<384x10xf32, #tpu.memory_space<vmem>>, %arg3: memref<384x1xf32, #tpu.memory_space<vmem>>, %arg4: memref<384x1xf32, #tpu.memory_space<vmem>>, %arg5: memref<1x1xf32, #tpu.memory_space<smem>>, %arg6: memref<1x128xf32, #tpu.memory_space<vmem>>) attributes {dimension_semantics = [#tpu.dimension_semantics<parallel>], iteration_bounds = array<i64: 1>, scalar_prefetch = 0 : i64, scratch_operands = 0 : i64, tpu.core_type = #tpu.core_type<tc>, window_params = [{transform_indices = @transform_0, window_bounds = array<i64: 10, 128>}, {pipeline_mode = #tpu.pipeline_mode<synchronous>, transform_indices = @transform_1, window_bounds = array<i64: 384, 10>}, {pipeline_mode = #tpu.pipeline_mode<synchronous>, transform_indices = @transform_2, window_bounds = array<i64: 384, 1>}, {pipeline_mode = #tpu.pipeline_mode<synchronous>, transform_indices = @transform_3, window_bounds = array<i64: 384, 1>}, {transform_indices = @transform_4, window_bounds = array<i64: 1, 1>}, {transform_indices = @transform_5, window_bounds = array<i64: 1, 128>}]} {
    %c0 = arith.constant 0 : index
    %c0_0 = arith.constant 0 : index
    %0 = vector.load %arg2[%c0, %c0_0] : memref<384x10xf32, #tpu.memory_space<vmem>>, vector<384x10xf32>
    %c0_1 = arith.constant 0 : index
    %c0_2 = arith.constant 0 : index
    %1 = vector.load %arg1[%c0_1, %c0_2] : memref<10x128xf32, #tpu.memory_space<vmem>>, vector<10x128xf32>
    %cst = arith.constant dense<0.000000e+00> : vector<384x128xf32>
    %2 = tpu.matmul %0, %1, %cst {dimension_numbers = #tpu.dot_dimension_numbers<[1], [0], [0], [1], [0, 0, 1, 1], [], []>} : vector<384x10xf32>, vector<10x128xf32>, vector<384x128xf32> -> vector<384x128xf32>
    %c0_3 = arith.constant 0 : index
    %c0_4 = arith.constant 0 : index
    %3 = vector.load %arg3[%c0_3, %c0_4] : memref<384x1xf32, #tpu.memory_space<vmem>>, vector<384x1xf32>
    %4 = vector.broadcast %3 : vector<384x1xf32> to vector<384x128xf32>
    %5 = arith.addf %2, %4 : vector<384x128xf32>
    %cst_5 = arith.constant 0.000000e+00 : f32
    %6 = vector.broadcast %cst_5 : f32 to vector<384x128xf32>
    %7 = arith.maximumf %5, %6 : vector<384x128xf32>
    %c0_6 = arith.constant 0 : index
    %c0_7 = arith.constant 0 : index
    %8 = vector.load %arg4[%c0_6, %c0_7] : memref<384x1xf32, #tpu.memory_space<vmem>>, vector<384x1xf32>
    %9 = vector.broadcast %8 : vector<384x1xf32> to vector<384x128xf32>
    %10 = arith.mulf %7, %9 : vector<384x128xf32>
    %cst_8 = arith.constant dense<0.000000e+00> : vector<128xf32>
    %11 = vector.multi_reduction <add>, %10, %cst_8 [0] : vector<384x128xf32> to vector<128xf32>
    %12 = vector.shape_cast %11 : vector<128xf32> to vector<1x128xf32>
    %c0_9 = arith.constant 0 : index
    %c0_10 = arith.constant 0 : index
    %13 = memref.load %arg5[%c0_9, %c0_10] : memref<1x1xf32, #tpu.memory_space<smem>>
    %14 = vector.broadcast %13 : f32 to vector<1x128xf32>
    %15 = arith.addf %12, %14 : vector<1x128xf32>
    %c0_11 = arith.constant 0 : index
    %c0_12 = arith.constant 0 : index
    %16 = vector.load %arg6[%c0_11, %c0_12] : memref<1x128xf32, #tpu.memory_space<vmem>>, vector<1x128xf32>
    tpu.vector_store %arg6[%c0_11, %c0_12], %15 {strides = array<i32>} : memref<1x128xf32, #tpu.memory_space<vmem>>, vector<1x128xf32>,
    return
  }
  func.func @transform_0(%arg0: i32) -> (i32, i32) {
    %c0_i32 = arith.constant 0 : i32
    %c0_i32_0 = arith.constant 0 : i32
    return %c0_i32, %arg0 : i32, i32
  }
  func.func @transform_1(%arg0: i32) -> (i32, i32) {
    %c0_i32 = arith.constant 0 : i32
    %c0_i32_0 = arith.constant 0 : i32
    %c0_i32_1 = arith.constant 0 : i32
    return %c0_i32, %c0_i32_0 : i32, i32
  }
  func.func @transform_2(%arg0: i32) -> (i32, i32) {
    %c0_i32 = arith.constant 0 : i32
    %c0_i32_0 = arith.constant 0 : i32
    %c0_i32_1 = arith.constant 0 : i32
    return %c0_i32, %c0_i32_0 : i32, i32
  }
  func.func @transform_3(%arg0: i32) -> (i32, i32) {
    %c0_i32 = arith.constant 0 : i32
    %c0_i32_0 = arith.constant 0 : i32
    %c0_i32_1 = arith.constant 0 : i32
    return %c0_i32, %c0_i32_0 : i32, i32
  }
  func.func @transform_4(%arg0: i32) -> (i32, i32) {
    %c0_i32 = arith.constant 0 : i32
    %c0_i32_0 = arith.constant 0 : i32
    %c0_i32_1 = arith.constant 0 : i32
    return %c0_i32, %c0_i32_0 : i32, i32
  }
  func.func @transform_5(%arg0: i32) -> (i32, i32) {
    %c0_i32 = arith.constant 0 : i32
    %c0_i32_0 = arith.constant 0 : i32
    return %c0_i32, %arg0 : i32, i32
  }
}

</mosaic_0001>

<llo_original>
// kernel: tpu_custom_call.1
$region0: #{tpu_custom_call.1}
  #allocation0 [shape = 'u32[]', space=smem, size = 0x4, offset = 0x4, fixed_abs, tag = 'smem constant byte address 0x4 - core index']
  #allocation1 [shape = 'u32[72,128]{1,0:T(1,128)}', space=vmem, size = 0x9000, scoped, tag = 'internal scratch']
  #allocation2 [shape = 'f32[1,1]{1,0:T(1,128)S(6)}', space=smem, size = 0x200, scoped, tag = 'scoped memory for tpu_custom_call.1']
  %s0 = inlined_call_operand.vmem [shape: f32[10,128], index: 0, kind: input, shape index: {}]
  %s1 = inlined_call_operand.vmem [shape: f32[384,10], index: 1, kind: input, shape index: {}]
  %s2 = inlined_call_operand.vmem [shape: f32[384,1], index: 2, kind: input, shape index: {}]
  %s3 = inlined_call_operand.vmem [shape: f32[384,1], index: 3, kind: input, shape index: {}]
  %s4 = inlined_call_operand.<no memory space> [shape: f32[1,1], index: 4, kind: input, shape index: {}]
  %s5 = inlined_call_operand.hbm [shape: f32[1,128], index: 5, kind: output, shape index: {}]
  %s6 = sld [smem:[#allocation0]]
  $region30: #{tpu_custom_call.1} parent=0
    _
  %s8 = ssub.s32 1, %s6
  %s9 = scalar_select 0, %s8, %s6
  %10 = sst [smem:[#allocation2]] %s4
  $region1: #{tpu_custom_call.1} parent=0
    #allocation3 [shape = 'u8[512]{0}', space=vmem, size = 0x400, scoped, tag = 'output window, operand 0, single buffered']
    #allocation4 [shape = 's32[1]{0}', space=sflag, size = 0x4, scoped, tag = 'scoped memory for tpu_custom_call.1']
    %11 = vsyncpa [#allocation4], 0
    // Predicated region
    $region2: #{tpu_custom_call.1} parent=1 // pred_check
      _
    $region3: #{tpu_custom_call.1} parent=1 // pred_check_branch
      %13 = sbr.rel (0) target = $region5
    $region4: #{tpu_custom_call.1} parent=1 // pred_region
      _
    $region5: #{tpu_custom_call.1} parent=1 // pred_fallthru
      _
    // Predicated region
    $region6: #{tpu_custom_call.1} parent=1 // pred_check
      _
    $region7: #{tpu_custom_call.1} parent=1 // pred_check_branch
      %15 = sbr.rel (0) target = $region9
    $region8: #{tpu_custom_call.1} parent=1 // pred_region
      _
    $region9: #{tpu_custom_call.1} parent=1 // pred_fallthru
      _
    // Predicated region
    $region10: #{tpu_custom_call.1} parent=1 // pred_check
      _
    $region11: #{tpu_custom_call.1} parent=1 // pred_check_branch
      %17 = sbr.rel (0) target = $region13
    $region12: #{tpu_custom_call.1} parent=1 // pred_region
      _
    $region13: #{tpu_custom_call.1} parent=1 // pred_fallthru
      _
    // Predicated region
    $region14: #{tpu_custom_call.1} parent=1 // pred_check
      _
    $region15: #{tpu_custom_call.1} parent=1 // pred_check_branch
      %19 = sbr.rel (0) target = $region17
    $region16: #{tpu_custom_call.1} parent=1 // pred_region
      _
    $region17: #{tpu_custom_call.1} parent=1 // pred_fallthru
      _
    // Predicated region
    $region18: #{tpu_custom_call.1} parent=1 // pred_check
      _
    $region19: #{tpu_custom_call.1} parent=1 // pred_check_branch
      %21 = sbr.rel (0) target = $region21
    $region20: #{tpu_custom_call.1} parent=1 // pred_region
      _
    $region21: #{tpu_custom_call.1} parent=1 // pred_fallthru
      _
    %v22 = vld [vmem:[%s1] sm:$0xff]
    %v23 = vld [vmem:[%s1 + $0x8] sm:$0xff]
    %v24 = vld [vmem:[%s1 + $0x10] sm:$0xff]
    %v25 = vld [vmem:[%s1 + $0x18] sm:$0xff]
    %v26 = vld [vmem:[%s1 + $0x20] sm:$0xff]
    %v27 = vld [vmem:[%s1 + $0x28] sm:$0xff]
    %v28 = vld [vmem:[%s1 + $0x30] sm:$0xff]
    %v29 = vld [vmem:[%s1 + $0x38] sm:$0xff]
    %v30 = vld [vmem:[%s1 + $0x40] sm:$0xff]
    %v31 = vld [vmem:[%s1 + $0x48] sm:$0xff]
    %v32 = vld [vmem:[%s1 + $0x50] sm:$0xff]
    %v33 = vld [vmem:[%s1 + $0x58] sm:$0xff]
    %v34 = vld [vmem:[%s1 + $0x60] sm:$0xff]
    %v35 = vld [vmem:[%s1 + $0x68] sm:$0xff]
    %v36 = vld [vmem:[%s1 + $0x70] sm:$0xff]
    %v37 = vld [vmem:[%s1 + $0x78] sm:$0xff]
    %v38 = vld [vmem:[%s1 + $0x80] sm:$0xff]
    %v39 = vld [vmem:[%s1 + $0x88] sm:$0xff]
    %v40 = vld [vmem:[%s1 + $0x90] sm:$0xff]
    %v41 = vld [vmem:[%s1 + $0x98] sm:$0xff]
    %v42 = vld [vmem:[%s1 + $0xa0] sm:$0xff]
    %v43 = vld [vmem:[%s1 + $0xa8] sm:$0xff]
    %v44 = vld [vmem:[%s1 + $0xb0] sm:$0xff]
    %v45 = vld [vmem:[%s1 + $0xb8] sm:$0xff]
    %v46 = vld [vmem:[%s1 + $0xc0] sm:$0xff]
    %v47 = vld [vmem:[%s1 + $0xc8] sm:$0xff]
    %v48 = vld [vmem:[%s1 + $0xd0] sm:$0xff]
    %v49 = vld [vmem:[%s1 + $0xd8] sm:$0xff]
    %v50 = vld [vmem:[%s1 + $0xe0] sm:$0xff]
    %v51 = vld [vmem:[%s1 + $0xe8] sm:$0xff]
    %v52 = vld [vmem:[%s1 + $0xf0] sm:$0xff]
    %v53 = vld [vmem:[%s1 + $0xf8] sm:$0xff]
    %v54 = vld [vmem:[%s1 + $0x100] sm:$0xff]
    %v55 = vld [vmem:[%s1 + $0x108] sm:$0xff]
    %v56 = vld [vmem:[%s1 + $0x110] sm:$0xff]
    %v57 = vld [vmem:[%s1 + $0x118] sm:$0xff]
    %v58 = vld [vmem:[%s1 + $0x120] sm:$0xff]
    %v59 = vld [vmem:[%s1 + $0x128] sm:$0xff]
    %v60 = vld [vmem:[%s1 + $0x130] sm:$0xff]
    %v61 = vld [vmem:[%s1 + $0x138] sm:$0xff]
    %v62 = vld [vmem:[%s1 + $0x140] sm:$0xff]
    %v63 = vld [vmem:[%s1 + $0x148] sm:$0xff]
    %v64 = vld [vmem:[%s1 + $0x150] sm:$0xff]
    %v65 = vld [vmem:[%s1 + $0x158] sm:$0xff]
    %v66 = vld [vmem:[%s1 + $0x160] sm:$0xff]
    %v67 = vld [vmem:[%s1 + $0x168] sm:$0xff]
    %v68 = vld [vmem:[%s1 + $0x170] sm:$0xff]
    %v69 = vld [vmem:[%s1 + $0x178] sm:$0xff]
    %v70 = vld [vmem:[%s0] sm:$0xff]
    %v71 = vld [vmem:[%s0 + $0x8] sm:$0x3]
    %v72 = vld [vmem:[%s2] sm:$0xff]
    %v73 = vld [vmem:[%s2 + $0x8] sm:$0xff]
    %v74 = vld [vmem:[%s2 + $0x10] sm:$0xff]
    %v75 = vld [vmem:[%s2 + $0x18] sm:$0xff]
    %v76 = vld [vmem:[%s2 + $0x20] sm:$0xff]
    %v77 = vld [vmem:[%s2 + $0x28] sm:$0xff]
    %v78 = vld [vmem:[%s2 + $0x30] sm:$0xff]
    %v79 = vld [vmem:[%s2 + $0x38] sm:$0xff]
    %v80 = vld [vmem:[%s2 + $0x40] sm:$0xff]
    %v81 = vld [vmem:[%s2 + $0x48] sm:$0xff]
    %v82 = vld [vmem:[%s2 + $0x50] sm:$0xff]
    %v83 = vld [vmem:[%s2 + $0x58] sm:$0xff]
    %v84 = vld [vmem:[%s2 + $0x60] sm:$0xff]
    %v85 = vld [vmem:[%s2 + $0x68] sm:$0xff]
    %v86 = vld [vmem:[%s2 + $0x70] sm:$0xff]
    %v87 = vld [vmem:[%s2 + $0x78] sm:$0xff]
    %v88 = vld [vmem:[%s2 + $0x80] sm:$0xff]
    %v89 = vld [vmem:[%s2 + $0x88] sm:$0xff]
    %v90 = vld [vmem:[%s2 + $0x90] sm:$0xff]
    %v91 = vld [vmem:[%s2 + $0x98] sm:$0xff]
    %v92 = vld [vmem:[%s2 + $0xa0] sm:$0xff]
    %v93 = vld [vmem:[%s2 + $0xa8] sm:$0xff]
    %v94 = vld [vmem:[%s2 + $0xb0] sm:$0xff]
    %v95 = vld [vmem:[%s2 + $0xb8] sm:$0xff]
    %v96 = vld [vmem:[%s2 + $0xc0] sm:$0xff]
    %v97 = vld [vmem:[%s2 + $0xc8] sm:$0xff]
    %v98 = vld [vmem:[%s2 + $0xd0] sm:$0xff]
    %v99 = vld [vmem:[%s2 + $0xd8] sm:$0xff]
    %v100 = vld [vmem:[%s2 + $0xe0] sm:$0xff]
    %v101 = vld [vmem:[%s2 + $0xe8] sm:$0xff]
    %v102 = vld [vmem:[%s2 + $0xf0] sm:$0xff]
    %v103 = vld [vmem:[%s2 + $0xf8] sm:$0xff]
    %v104 = vld [vmem:[%s2 + $0x100] sm:$0xff]
    %v105 = vld [vmem:[%s2 + $0x108] sm:$0xff]
    %v106 = vld [vmem:[%s2 + $0x110] sm:$0xff]
    %v107 = vld [vmem:[%s2 + $0x118] sm:$0xff]
    %v108 = vld [vmem:[%s2 + $0x120] sm:$0xff]
    %v109 = vld [vmem:[%s2 + $0x128] sm:$0xff]
    %v110 = vld [vmem:[%s2 + $0x130] sm:$0xff]
    %v111 = vld [vmem:[%s2 + $0x138] sm:$0xff]
    %v112 = vld [vmem:[%s2 + $0x140] sm:$0xff]
    %v113 = vld [vmem:[%s2 + $0x148] sm:$0xff]
    %v114 = vld [vmem:[%s2 + $0x150] sm:$0xff]
    %v115 = vld [vmem:[%s2 + $0x158] sm:$0xff]
    %v116 = vld [vmem:[%s2 + $0x160] sm:$0xff]
    %v117 = vld [vmem:[%s2 + $0x168] sm:$0xff]
    %v118 = vld [vmem:[%s2 + $0x170] sm:$0xff]
    %v119 = vld [vmem:[%s2 + $0x178] sm:$0xff]
    %121 = vset.pattern.permute.xlu0 0
    %122 = vperm.xlu0 %121, %v72
    %v123 = vpop.permute.xlu0 %122
    %126 = vset.pattern.permute.xlu0 0
    %127 = vperm.xlu0 %126, %v73
    %v128 = vpop.permute.xlu0 %127
    %131 = vset.pattern.permute.xlu0 0
    %132 = vperm.xlu0 %131, %v74
    %v133 = vpop.permute.xlu0 %132
    %136 = vset.pattern.permute.xlu0 0
    %137 = vperm.xlu0 %136, %v75
    %v138 = vpop.permute.xlu0 %137
    %141 = vset.pattern.permute.xlu0 0
    %142 = vperm.xlu0 %141, %v76
    %v143 = vpop.permute.xlu0 %142
    %146 = vset.pattern.permute.xlu0 0
    %147 = vperm.xlu0 %146, %v77
    %v148 = vpop.permute.xlu0 %147
    %151 = vset.pattern.permute.xlu0 0
    %152 = vperm.xlu0 %151, %v78
    %v153 = vpop.permute.xlu0 %152
    %156 = vset.pattern.permute.xlu0 0
    %157 = vperm.xlu0 %156, %v79
    %v158 = vpop.permute.xlu0 %157
    %161 = vset.pattern.permute.xlu0 0
    %162 = vperm.xlu0 %161, %v80
    %v163 = vpop.permute.xlu0 %162
    %166 = vset.pattern.permute.xlu0 0
    %167 = vperm.xlu0 %166, %v81
    %v168 = vpop.permute.xlu0 %167
    %171 = vset.pattern.permute.xlu0 0
    %172 = vperm.xlu0 %171, %v82
    %v173 = vpop.permute.xlu0 %172
    %176 = vset.pattern.permute.xlu0 0
    %177 = vperm.xlu0 %176, %v83
    %v178 = vpop.permute.xlu0 %177
    %181 = vset.pattern.permute.xlu0 0
    %182 = vperm.xlu0 %181, %v84
    %v183 = vpop.permute.xlu0 %182
    %186 = vset.pattern.permute.xlu0 0
    %187 = vperm.xlu0 %186, %v85
    %v188 = vpop.permute.xlu0 %187
    %191 = vset.pattern.permute.xlu0 0
    %192 = vperm.xlu0 %191, %v86
    %v193 = vpop.permute.xlu0 %192
    %196 = vset.pattern.permute.xlu0 0
    %197 = vperm.xlu0 %196, %v87
    %v198 = vpop.permute.xlu0 %197
    %201 = vset.pattern.permute.xlu0 0
    %202 = vperm.xlu0 %201, %v88
    %v203 = vpop.permute.xlu0 %202
    %206 = vset.pattern.permute.xlu0 0
    %207 = vperm.xlu0 %206, %v89
    %v208 = vpop.permute.xlu0 %207
    %211 = vset.pattern.permute.xlu0 0
    %212 = vperm.xlu0 %211, %v90
    %v213 = vpop.permute.xlu0 %212
    %216 = vset.pattern.permute.xlu0 0
    %217 = vperm.xlu0 %216, %v91
    %v218 = vpop.permute.xlu0 %217
    %221 = vset.pattern.permute.xlu0 0
    %222 = vperm.xlu0 %221, %v92
    %v223 = vpop.permute.xlu0 %222
    %226 = vset.pattern.permute.xlu0 0
    %227 = vperm.xlu0 %226, %v93
    %v228 = vpop.permute.xlu0 %227
    %231 = vset.pattern.permute.xlu0 0
    %232 = vperm.xlu0 %231, %v94
    %v233 = vpop.permute.xlu0 %232
    %236 = vset.pattern.permute.xlu0 0
    %237 = vperm.xlu0 %236, %v95
    %v238 = vpop.permute.xlu0 %237
    %241 = vset.pattern.permute.xlu0 0
    %242 = vperm.xlu0 %241, %v96
    %v243 = vpop.permute.xlu0 %242
    %246 = vset.pattern.permute.xlu0 0
    %247 = vperm.xlu0 %246, %v97
    %v248 = vpop.permute.xlu0 %247
    %251 = vset.pattern.permute.xlu0 0
    %252 = vperm.xlu0 %251, %v98
    %v253 = vpop.permute.xlu0 %252
    %256 = vset.pattern.permute.xlu0 0
    %257 = vperm.xlu0 %256, %v99
    %v258 = vpop.permute.xlu0 %257
    %261 = vset.pattern.permute.xlu0 0
    %262 = vperm.xlu0 %261, %v100
    %v263 = vpop.permute.xlu0 %262
    %266 = vset.pattern.permute.xlu0 0
    %267 = vperm.xlu0 %266, %v101
    %v268 = vpop.permute.xlu0 %267
    %271 = vset.pattern.permute.xlu0 0
    %272 = vperm.xlu0 %271, %v102
    %v273 = vpop.permute.xlu0 %272
    %276 = vset.pattern.permute.xlu0 0
    %277 = vperm.xlu0 %276, %v103
    %v278 = vpop.permute.xlu0 %277
    %281 = vset.pattern.permute.xlu0 0
    %282 = vperm.xlu0 %281, %v104
    %v283 = vpop.permute.xlu0 %282
    %286 = vset.pattern.permute.xlu0 0
    %287 = vperm.xlu0 %286, %v105
    %v288 = vpop.permute.xlu0 %287
    %291 = vset.pattern.permute.xlu0 0
    %292 = vperm.xlu0 %291, %v106
    %v293 = vpop.permute.xlu0 %292
    %296 = vset.pattern.permute.xlu0 0
    %297 = vperm.xlu0 %296, %v107
    %v298 = vpop.permute.xlu0 %297
    %301 = vset.pattern.permute.xlu0 0
    %302 = vperm.xlu0 %301, %v108
    %v303 = vpop.permute.xlu0 %302
    %306 = vset.pattern.permute.xlu0 0
    %307 = vperm.xlu0 %306, %v109
    %v308 = vpop.permute.xlu0 %307
    %311 = vset.pattern.permute.xlu0 0
    %312 = vperm.xlu0 %311, %v110
    %v313 = vpop.permute.xlu0 %312
    %316 = vset.pattern.permute.xlu0 0
    %317 = vperm.xlu0 %316, %v111
    %v318 = vpop.permute.xlu0 %317
    %321 = vset.pattern.permute.xlu0 0
    %322 = vperm.xlu0 %321, %v112
    %v323 = vpop.permute.xlu0 %322
    %326 = vset.pattern.permute.xlu0 0
    %327 = vperm.xlu0 %326, %v113
    %v328 = vpop.permute.xlu0 %327
    %331 = vset.pattern.permute.xlu0 0
    %332 = vperm.xlu0 %331, %v114
    %v333 = vpop.permute.xlu0 %332
    %336 = vset.pattern.permute.xlu0 0
    %337 = vperm.xlu0 %336, %v115
    %v338 = vpop.permute.xlu0 %337
    %341 = vset.pattern.permute.xlu0 0
    %342 = vperm.xlu0 %341, %v116
    %v343 = vpop.permute.xlu0 %342
    %346 = vset.pattern.permute.xlu0 0
    %347 = vperm.xlu0 %346, %v117
    %v348 = vpop.permute.xlu0 %347
    %351 = vset.pattern.permute.xlu0 0
    %352 = vperm.xlu0 %351, %v118
    %v353 = vpop.permute.xlu0 %352
    %356 = vset.pattern.permute.xlu0 0
    %357 = vperm.xlu0 %356, %v119
    %v358 = vpop.permute.xlu0 %357
    %vm360 = vcmask 80896
    %v362 = vsel %vm360, %v22, 0
    %v365 = vsel %vm360, %v23, 0
    %v368 = vsel %vm360, %v24, 0
    %v371 = vsel %vm360, %v25, 0
    %v374 = vsel %vm360, %v26, 0
    %v377 = vsel %vm360, %v27, 0
    %v380 = vsel %vm360, %v28, 0
    %v383 = vsel %vm360, %v29, 0
    %v386 = vsel %vm360, %v30, 0
    %v389 = vsel %vm360, %v31, 0
    %v392 = vsel %vm360, %v32, 0
    %v395 = vsel %vm360, %v33, 0
    %v398 = vsel %vm360, %v34, 0
    %v401 = vsel %vm360, %v35, 0
    %v404 = vsel %vm360, %v36, 0
    %v407 = vsel %vm360, %v37, 0
    %v410 = vsel %vm360, %v38, 0
    %v413 = vsel %vm360, %v39, 0
    %v416 = vsel %vm360, %v40, 0
    %v419 = vsel %vm360, %v41, 0
    %v422 = vsel %vm360, %v42, 0
    %v425 = vsel %vm360, %v43, 0
    %v428 = vsel %vm360, %v44, 0
    %v431 = vsel %vm360, %v45, 0
    %v434 = vsel %vm360, %v46, 0
    %v437 = vsel %vm360, %v47, 0
    %v440 = vsel %vm360, %v48, 0
    %v443 = vsel %vm360, %v49, 0
    %v446 = vsel %vm360, %v50, 0
    %v449 = vsel %vm360, %v51, 0
    %v452 = vsel %vm360, %v52, 0
    %v455 = vsel %vm360, %v53, 0
    %v458 = vsel %vm360, %v54, 0
    %v461 = vsel %vm360, %v55, 0
    %v464 = vsel %vm360, %v56, 0
    %v467 = vsel %vm360, %v57, 0
    %v470 = vsel %vm360, %v58, 0
    %v473 = vsel %vm360, %v59, 0
    %v476 = vsel %vm360, %v60, 0
    %v479 = vsel %vm360, %v61, 0
    %v482 = vsel %vm360, %v62, 0
    %v485 = vsel %vm360, %v63, 0
    %v488 = vsel %vm360, %v64, 0
    %v491 = vsel %vm360, %v65, 0
    %v494 = vsel %vm360, %v66, 0
    %v497 = vsel %vm360, %v67, 0
    %v500 = vsel %vm360, %v68, 0
    %v503 = vsel %vm360, %v69, 0
    %vm505 = vcmask 1041408
    %v507 = vsel %vm505, %v71, 0
    %509 = vmatpush.msra.mxu0 0.0
    %510 = vmatpush.msra.mxu0 0.0
    %511 = vmatpush.msra.mxu0 0.0
    %512 = vmatpush.msra.mxu0 0.0
    %513 = vmatpush.msra.mxu0 0.0
    %514 = vmatpush.msra.mxu0 0.0
    %515 = vmatpush.msra.mxu0 0.0
    %516 = vmatpush.msra.mxu0 0.0
    %517 = vmatpush.msra.mxu0 0.0
    %518 = vmatpush.msra.mxu0 0.0
    %519 = vmatpush.msra.mxu0 0.0
    %520 = vmatpush.msra.mxu0 0.0
    %521 = vmatpush.msra.mxu0 0.0
    %522 = vmatpush.msra.mxu0 0.0
    %523 = vmatpush.msra.mxu0 %v507
    %524 = vmatpush.msra.mxu0 %v70
    %525 = vmatmul.f32.gmra.mxu0 %v362
    %v526 = vpop.f32.mrf.mxu0
    %v527 = vadd.f32 %v123, %v526
    %528 = vmatmul.f32.gmra.mxu0 %v365
    %v529 = vpop.f32.mrf.mxu0
    %v530 = vadd.f32 %v128, %v529
    %531 = vmatmul.f32.gmra.mxu0 %v368
    %v532 = vpop.f32.mrf.mxu0
    %v533 = vadd.f32 %v133, %v532
    %534 = vmatmul.f32.gmra.mxu0 %v371
    %v535 = vpop.f32.mrf.mxu0
    %v536 = vadd.f32 %v138, %v535
    %537 = vmatmul.f32.gmra.mxu0 %v374
    %v538 = vpop.f32.mrf.mxu0
    %v539 = vadd.f32 %v143, %v538
    %540 = vmatmul.f32.gmra.mxu0 %v377
    %v541 = vpop.f32.mrf.mxu0
    %v542 = vadd.f32 %v148, %v541
    %543 = vmatmul.f32.gmra.mxu0 %v380
    %v544 = vpop.f32.mrf.mxu0
    %v545 = vadd.f32 %v153, %v544
    %546 = vmatmul.f32.gmra.mxu0 %v383
    %v547 = vpop.f32.mrf.mxu0
    %v548 = vadd.f32 %v158, %v547
    %549 = vmatmul.f32.gmra.mxu0 %v386
    %v550 = vpop.f32.mrf.mxu0
    %v551 = vadd.f32 %v163, %v550
    %552 = vmatmul.f32.gmra.mxu0 %v389
    %v553 = vpop.f32.mrf.mxu0
    %v554 = vadd.f32 %v168, %v553
    %555 = vmatmul.f32.gmra.mxu0 %v392
    %v556 = vpop.f32.mrf.mxu0
    %v557 = vadd.f32 %v173, %v556
    %558 = vmatmul.f32.gmra.mxu0 %v395
    %v559 = vpop.f32.mrf.mxu0
    %v560 = vadd.f32 %v178, %v559
    %561 = vmatmul.f32.gmra.mxu0 %v398
    %v562 = vpop.f32.mrf.mxu0
    %v563 = vadd.f32 %v183, %v562
    %564 = vmatmul.f32.gmra.mxu0 %v401
    %v565 = vpop.f32.mrf.mxu0
    %v566 = vadd.f32 %v188, %v565
    %567 = vmatmul.f32.gmra.mxu0 %v404
    %v568 = vpop.f32.mrf.mxu0
    %v569 = vadd.f32 %v193, %v568
    %570 = vmatmul.f32.gmra.mxu0 %v407
    %v571 = vpop.f32.mrf.mxu0
    %v572 = vadd.f32 %v198, %v571
    %573 = vmatmul.f32.gmra.mxu0 %v410
    %v574 = vpop.f32.mrf.mxu0
    %v575 = vadd.f32 %v203, %v574
    %576 = vmatmul.f32.gmra.mxu0 %v413
    %v577 = vpop.f32.mrf.mxu0
    %v578 = vadd.f32 %v208, %v577
    %579 = vmatmul.f32.gmra.mxu0 %v416
    %v580 = vpop.f32.mrf.mxu0
    %v581 = vadd.f32 %v213, %v580
    %582 = vmatmul.f32.gmra.mxu0 %v419
    %v583 = vpop.f32.mrf.mxu0
    %v584 = vadd.f32 %v218, %v583
    %585 = vmatmul.f32.gmra.mxu0 %v422
    %v586 = vpop.f32.mrf.mxu0
    %v587 = vadd.f32 %v223, %v586
    %588 = vmatmul.f32.gmra.mxu0 %v425
    %v589 = vpop.f32.mrf.mxu0
    %v590 = vadd.f32 %v228, %v589
    %591 = vmatmul.f32.gmra.mxu0 %v428
    %v592 = vpop.f32.mrf.mxu0
    %v593 = vadd.f32 %v233, %v592
    %594 = vmatmul.f32.gmra.mxu0 %v431
    %v595 = vpop.f32.mrf.mxu0
    %v596 = vadd.f32 %v238, %v595
    %597 = vmatmul.f32.gmra.mxu0 %v434
    %v598 = vpop.f32.mrf.mxu0
    %v599 = vadd.f32 %v243, %v598
    %600 = vmatmul.f32.gmra.mxu0 %v437
    %v601 = vpop.f32.mrf.mxu0
    %v602 = vadd.f32 %v248, %v601
    %603 = vmatmul.f32.gmra.mxu0 %v440
    %v604 = vpop.f32.mrf.mxu0
    %v605 = vadd.f32 %v253, %v604
    %606 = vmatmul.f32.gmra.mxu0 %v443
    %v607 = vpop.f32.mrf.mxu0
    %v608 = vadd.f32 %v258, %v607
    %609 = vmatmul.f32.gmra.mxu0 %v446
    %v610 = vpop.f32.mrf.mxu0
    %v611 = vadd.f32 %v263, %v610
    %612 = vmatmul.f32.gmra.mxu0 %v449
    %v613 = vpop.f32.mrf.mxu0
    %v614 = vadd.f32 %v268, %v613
    %615 = vmatmul.f32.gmra.mxu0 %v452
    %v616 = vpop.f32.mrf.mxu0
    %v617 = vadd.f32 %v273, %v616
    %618 = vmatmul.f32.gmra.mxu0 %v455
    %v619 = vpop.f32.mrf.mxu0
    %v620 = vadd.f32 %v278, %v619
    %621 = vmatmul.f32.gmra.mxu0 %v458
    %v622 = vpop.f32.mrf.mxu0
    %v623 = vadd.f32 %v283, %v622
    %624 = vmatmul.f32.gmra.mxu0 %v461
    %v625 = vpop.f32.mrf.mxu0
    %v626 = vadd.f32 %v288, %v625
    %627 = vmatmul.f32.gmra.mxu0 %v464
    %v628 = vpop.f32.mrf.mxu0
    %v629 = vadd.f32 %v293, %v628
    %630 = vmatmul.f32.gmra.mxu0 %v467
    %v631 = vpop.f32.mrf.mxu0
    %v632 = vadd.f32 %v298, %v631
    %633 = vmatmul.f32.gmra.mxu0 %v470
    %v634 = vpop.f32.mrf.mxu0
    %v635 = vadd.f32 %v303, %v634
    %636 = vmatmul.f32.gmra.mxu0 %v473
    %v637 = vpop.f32.mrf.mxu0
    %v638 = vadd.f32 %v308, %v637
    %639 = vmatmul.f32.gmra.mxu0 %v476
    %v640 = vpop.f32.mrf.mxu0
    %v641 = vadd.f32 %v313, %v640
    %642 = vmatmul.f32.gmra.mxu0 %v479
    %v643 = vpop.f32.mrf.mxu0
    %v644 = vadd.f32 %v318, %v643
    %645 = vmatmul.f32.gmra.mxu0 %v482
    %v646 = vpop.f32.mrf.mxu0
    %v647 = vadd.f32 %v323, %v646
    %648 = vmatmul.f32.gmra.mxu0 %v485
    %v649 = vpop.f32.mrf.mxu0
    %v650 = vadd.f32 %v328, %v649
    %651 = vmatmul.f32.gmra.mxu0 %v488
    %v652 = vpop.f32.mrf.mxu0
    %v653 = vadd.f32 %v333, %v652
    %654 = vmatmul.f32.gmra.mxu0 %v491
    %v655 = vpop.f32.mrf.mxu0
    %v656 = vadd.f32 %v338, %v655
    %657 = vmatmul.f32.gmra.mxu0 %v494
    %v658 = vpop.f32.mrf.mxu0
    %v659 = vadd.f32 %v343, %v658
    %660 = vmatmul.f32.gmra.mxu0 %v497
    %v661 = vpop.f32.mrf.mxu0
    %v662 = vadd.f32 %v348, %v661
    %663 = vmatmul.f32.gmra.mxu0 %v500
    %v664 = vpop.f32.mrf.mxu0
    %v665 = vadd.f32 %v353, %v664
    %666 = vmatmul.f32.gmra.mxu0 %v503
    %v667 = vpop.f32.mrf.mxu0
    %v668 = vadd.f32 %v358, %v667
    %669 = vdwg.mxu0
    %v670 = vmax.f32 %v527, 0.0
    %v671 = vmax.f32 %v530, 0.0
    %v672 = vmax.f32 %v533, 0.0
    %v673 = vmax.f32 %v536, 0.0
    %v674 = vmax.f32 %v539, 0.0
    %v675 = vmax.f32 %v542, 0.0
    %v676 = vmax.f32 %v545, 0.0
    %v677 = vmax.f32 %v548, 0.0
    %v678 = vmax.f32 %v551, 0.0
    %v679 = vmax.f32 %v554, 0.0
    %v680 = vmax.f32 %v557, 0.0
    %v681 = vmax.f32 %v560, 0.0
    %v682 = vmax.f32 %v563, 0.0
    %v683 = vmax.f32 %v566, 0.0
    %v684 = vmax.f32 %v569, 0.0
    %v685 = vmax.f32 %v572, 0.0
    %v686 = vmax.f32 %v575, 0.0
    %v687 = vmax.f32 %v578, 0.0
    %v688 = vmax.f32 %v581, 0.0
    %v689 = vmax.f32 %v584, 0.0
    %v690 = vmax.f32 %v587, 0.0
    %v691 = vmax.f32 %v590, 0.0
    %v692 = vmax.f32 %v593, 0.0
    %v693 = vmax.f32 %v596, 0.0
    %v694 = vmax.f32 %v599, 0.0
    %v695 = vmax.f32 %v602, 0.0
    %v696 = vmax.f32 %v605, 0.0
    %v697 = vmax.f32 %v608, 0.0
    %v698 = vmax.f32 %v611, 0.0
    %v699 = vmax.f32 %v614, 0.0
    %v700 = vmax.f32 %v617, 0.0
    %v701 = vmax.f32 %v620, 0.0
    %v702 = vmax.f32 %v623, 0.0
    %v703 = vmax.f32 %v626, 0.0
    %v704 = vmax.f32 %v629, 0.0
    %v705 = vmax.f32 %v632, 0.0
    %v706 = vmax.f32 %v635, 0.0
    %v707 = vmax.f32 %v638, 0.0
    %v708 = vmax.f32 %v641, 0.0
    %v709 = vmax.f32 %v644, 0.0
    %v710 = vmax.f32 %v647, 0.0
    %v711 = vmax.f32 %v650, 0.0
    %v712 = vmax.f32 %v653, 0.0
    %v713 = vmax.f32 %v656, 0.0
    %v714 = vmax.f32 %v659, 0.0
    %v715 = vmax.f32 %v662, 0.0
    %v716 = vmax.f32 %v665, 0.0
    %v717 = vmax.f32 %v668, 0.0
    %v718 = vld [vmem:[%s3] sm:$0xff]
    %v719 = vld [vmem:[%s3 + $0x8] sm:$0xff]
    %v720 = vld [vmem:[%s3 + $0x10] sm:$0xff]
    %v721 = vld [vmem:[%s3 + $0x18] sm:$0xff]
    %v722 = vld [vmem:[%s3 + $0x20] sm:$0xff]
    %v723 = vld [vmem:[%s3 + $0x28] sm:$0xff]
    %v724 = vld [vmem:[%s3 + $0x30] sm:$0xff]
    %v725 = vld [vmem:[%s3 + $0x38] sm:$0xff]
    %v726 = vld [vmem:[%s3 + $0x40] sm:$0xff]
    %v727 = vld [vmem:[%s3 + $0x48] sm:$0xff]
    %v728 = vld [vmem:[%s3 + $0x50] sm:$0xff]
    %v729 = vld [vmem:[%s3 + $0x58] sm:$0xff]
    %v730 = vld [vmem:[%s3 + $0x60] sm:$0xff]
    %v731 = vld [vmem:[%s3 + $0x68] sm:$0xff]
    %v732 = vld [vmem:[%s3 + $0x70] sm:$0xff]
    %v733 = vld [vmem:[%s3 + $0x78] sm:$0xff]
    %v734 = vld [vmem:[%s3 + $0x80] sm:$0xff]
    %v735 = vld [vmem:[%s3 + $0x88] sm:$0xff]
    %v736 = vld [vmem:[%s3 + $0x90] sm:$0xff]
    %v737 = vld [vmem:[%s3 + $0x98] sm:$0xff]
    %v738 = vld [vmem:[%s3 + $0xa0] sm:$0xff]
    %v739 = vld [vmem:[%s3 + $0xa8] sm:$0xff]
    %v740 = vld [vmem:[%s3 + $0xb0] sm:$0xff]
    %v741 = vld [vmem:[%s3 + $0xb8] sm:$0xff]
    %v742 = vld [vmem:[%s3 + $0xc0] sm:$0xff]
    %v743 = vld [vmem:[%s3 + $0xc8] sm:$0xff]
    %v744 = vld [vmem:[%s3 + $0xd0] sm:$0xff]
    %v745 = vld [vmem:[%s3 + $0xd8] sm:$0xff]
    %v746 = vld [vmem:[%s3 + $0xe0] sm:$0xff]
    %v747 = vld [vmem:[%s3 + $0xe8] sm:$0xff]
    %v748 = vld [vmem:[%s3 + $0xf0] sm:$0xff]
    %v749 = vld [vmem:[%s3 + $0xf8] sm:$0xff]
    %v750 = vld [vmem:[%s3 + $0x100] sm:$0xff]
    %v751 = vld [vmem:[%s3 + $0x108] sm:$0xff]
    %v752 = vld [vmem:[%s3 + $0x110] sm:$0xff]
    %v753 = vld [vmem:[%s3 + $0x118] sm:$0xff]
    %v754 = vld [vmem:[%s3 + $0x120] sm:$0xff]
    %v755 = vld [vmem:[%s3 + $0x128] sm:$0xff]
    %v756 = vld [vmem:[%s3 + $0x130] sm:$0xff]
    %v757 = vld [vmem:[%s3 + $0x138] sm:$0xff]
    %v758 = vld [vmem:[%s3 + $0x140] sm:$0xff]
    %v759 = vld [vmem:[%s3 + $0x148] sm:$0xff]
    %v760 = vld [vmem:[%s3 + $0x150] sm:$0xff]
    %v761 = vld [vmem:[%s3 + $0x158] sm:$0xff]
    %v762 = vld [vmem:[%s3 + $0x160] sm:$0xff]
    %v763 = vld [vmem:[%s3 + $0x168] sm:$0xff]
    %v764 = vld [vmem:[%s3 + $0x170] sm:$0xff]
    %v765 = vld [vmem:[%s3 + $0x178] sm:$0xff]
    %767 = vset.pattern.permute.xlu0 0
    %768 = vperm.xlu0 %767, %v718
    %v769 = vpop.permute.xlu0 %768
    %772 = vset.pattern.permute.xlu0 0
    %773 = vperm.xlu0 %772, %v719
    %v774 = vpop.permute.xlu0 %773
    %777 = vset.pattern.permute.xlu0 0
    %778 = vperm.xlu0 %777, %v720
    %v779 = vpop.permute.xlu0 %778
    %782 = vset.pattern.permute.xlu0 0
    %783 = vperm.xlu0 %782, %v721
    %v784 = vpop.permute.xlu0 %783
    %787 = vset.pattern.permute.xlu0 0
    %788 = vperm.xlu0 %787, %v722
    %v789 = vpop.permute.xlu0 %788
    %792 = vset.pattern.permute.xlu0 0
    %793 = vperm.xlu0 %792, %v723
    %v794 = vpop.permute.xlu0 %793
    %797 = vset.pattern.permute.xlu0 0
    %798 = vperm.xlu0 %797, %v724
    %v799 = vpop.permute.xlu0 %798
    %802 = vset.pattern.permute.xlu0 0
    %803 = vperm.xlu0 %802, %v725
    %v804 = vpop.permute.xlu0 %803
    %807 = vset.pattern.permute.xlu0 0
    %808 = vperm.xlu0 %807, %v726
    %v809 = vpop.permute.xlu0 %808
    %812 = vset.pattern.permute.xlu0 0
    %813 = vperm.xlu0 %812, %v727
    %v814 = vpop.permute.xlu0 %813
    %817 = vset.pattern.permute.xlu0 0
    %818 = vperm.xlu0 %817, %v728
    %v819 = vpop.permute.xlu0 %818
    %822 = vset.pattern.permute.xlu0 0
    %823 = vperm.xlu0 %822, %v729
    %v824 = vpop.permute.xlu0 %823
    %827 = vset.pattern.permute.xlu0 0
    %828 = vperm.xlu0 %827, %v730
    %v829 = vpop.permute.xlu0 %828
    %832 = vset.pattern.permute.xlu0 0
    %833 = vperm.xlu0 %832, %v731
    %v834 = vpop.permute.xlu0 %833
    %837 = vset.pattern.permute.xlu0 0
    %838 = vperm.xlu0 %837, %v732
    %v839 = vpop.permute.xlu0 %838
    %842 = vset.pattern.permute.xlu0 0
    %843 = vperm.xlu0 %842, %v733
    %v844 = vpop.permute.xlu0 %843
    %847 = vset.pattern.permute.xlu0 0
    %848 = vperm.xlu0 %847, %v734
    %v849 = vpop.permute.xlu0 %848
    %852 = vset.pattern.permute.xlu0 0
    %853 = vperm.xlu0 %852, %v735
    %v854 = vpop.permute.xlu0 %853
    %857 = vset.pattern.permute.xlu0 0
    %858 = vperm.xlu0 %857, %v736
    %v859 = vpop.permute.xlu0 %858
    %862 = vset.pattern.permute.xlu0 0
    %863 = vperm.xlu0 %862, %v737
    %v864 = vpop.permute.xlu0 %863
    %867 = vset.pattern.permute.xlu0 0
    %868 = vperm.xlu0 %867, %v738
    %v869 = vpop.permute.xlu0 %868
    %872 = vset.pattern.permute.xlu0 0
    %873 = vperm.xlu0 %872, %v739
    %v874 = vpop.permute.xlu0 %873
    %877 = vset.pattern.permute.xlu0 0
    %878 = vperm.xlu0 %877, %v740
    %v879 = vpop.permute.xlu0 %878
    %882 = vset.pattern.permute.xlu0 0
    %883 = vperm.xlu0 %882, %v741
    %v884 = vpop.permute.xlu0 %883
    %887 = vset.pattern.permute.xlu0 0
    %888 = vperm.xlu0 %887, %v742
    %v889 = vpop.permute.xlu0 %888
    %892 = vset.pattern.permute.xlu0 0
    %893 = vperm.xlu0 %892, %v743
    %v894 = vpop.permute.xlu0 %893
    %897 = vset.pattern.permute.xlu0 0
    %898 = vperm.xlu0 %897, %v744
    %v899 = vpop.permute.xlu0 %898
    %902 = vset.pattern.permute.xlu0 0
    %903 = vperm.xlu0 %902, %v745
    %v904 = vpop.permute.xlu0 %903
    %907 = vset.pattern.permute.xlu0 0
    %908 = vperm.xlu0 %907, %v746
    %v909 = vpop.permute.xlu0 %908
    %912 = vset.pattern.permute.xlu0 0
    %913 = vperm.xlu0 %912, %v747
    %v914 = vpop.permute.xlu0 %913
    %917 = vset.pattern.permute.xlu0 0
    %918 = vperm.xlu0 %917, %v748
    %v919 = vpop.permute.xlu0 %918
    %922 = vset.pattern.permute.xlu0 0
    %923 = vperm.xlu0 %922, %v749
    %v924 = vpop.permute.xlu0 %923
    %927 = vset.pattern.permute.xlu0 0
    %928 = vperm.xlu0 %927, %v750
    %v929 = vpop.permute.xlu0 %928
    %932 = vset.pattern.permute.xlu0 0
    %933 = vperm.xlu0 %932, %v751
    %v934 = vpop.permute.xlu0 %933
    %937 = vset.pattern.permute.xlu0 0
    %938 = vperm.xlu0 %937, %v752
    %v939 = vpop.permute.xlu0 %938
    %942 = vset.pattern.permute.xlu0 0
    %943 = vperm.xlu0 %942, %v753
    %v944 = vpop.permute.xlu0 %943
    %947 = vset.pattern.permute.xlu0 0
    %948 = vperm.xlu0 %947, %v754
    %v949 = vpop.permute.xlu0 %948
    %952 = vset.pattern.permute.xlu0 0
    %953 = vperm.xlu0 %952, %v755
    %v954 = vpop.permute.xlu0 %953
    %957 = vset.pattern.permute.xlu0 0
    %958 = vperm.xlu0 %957, %v756
    %v959 = vpop.permute.xlu0 %958
    %962 = vset.pattern.permute.xlu0 0
    %963 = vperm.xlu0 %962, %v757
    %v964 = vpop.permute.xlu0 %963
    %967 = vset.pattern.permute.xlu0 0
    %968 = vperm.xlu0 %967, %v758
    %v969 = vpop.permute.xlu0 %968
    %972 = vset.pattern.permute.xlu0 0
    %973 = vperm.xlu0 %972, %v759
    %v974 = vpop.permute.xlu0 %973
    %977 = vset.pattern.permute.xlu0 0
    %978 = vperm.xlu0 %977, %v760
    %v979 = vpop.permute.xlu0 %978
    %982 = vset.pattern.permute.xlu0 0
    %983 = vperm.xlu0 %982, %v761
    %v984 = vpop.permute.xlu0 %983
    %987 = vset.pattern.permute.xlu0 0
    %988 = vperm.xlu0 %987, %v762
    %v989 = vpop.permute.xlu0 %988
    %992 = vset.pattern.permute.xlu0 0
    %993 = vperm.xlu0 %992, %v763
    %v994 = vpop.permute.xlu0 %993
    %997 = vset.pattern.permute.xlu0 0
    %998 = vperm.xlu0 %997, %v764
    %v999 = vpop.permute.xlu0 %998
    %1002 = vset.pattern.permute.xlu0 0
    %1003 = vperm.xlu0 %1002, %v765
    %v1004 = vpop.permute.xlu0 %1003
    %v1006 = vmul.f32 %v670, %v769
    %v1007 = vmul.f32 %v671, %v774
    %v1008 = vmul.f32 %v672, %v779
    %v1009 = vmul.f32 %v673, %v784
    %v1010 = vmul.f32 %v674, %v789
    %v1011 = vmul.f32 %v675, %v794
    %v1012 = vmul.f32 %v676, %v799
    %v1013 = vmul.f32 %v677, %v804
    %v1014 = vmul.f32 %v678, %v809
    %v1015 = vmul.f32 %v679, %v814
    %v1016 = vmul.f32 %v680, %v819
    %v1017 = vmul.f32 %v681, %v824
    %v1018 = vmul.f32 %v682, %v829
    %v1019 = vmul.f32 %v683, %v834
    %v1020 = vmul.f32 %v684, %v839
    %v1021 = vmul.f32 %v685, %v844
    %v1022 = vmul.f32 %v686, %v849
    %v1023 = vmul.f32 %v687, %v854
    %v1024 = vmul.f32 %v688, %v859
    %v1025 = vmul.f32 %v689, %v864
    %v1026 = vmul.f32 %v690, %v869
    %v1027 = vmul.f32 %v691, %v874
    %v1028 = vmul.f32 %v692, %v879
    %v1029 = vmul.f32 %v693, %v884
    %v1030 = vmul.f32 %v694, %v889
    %v1031 = vmul.f32 %v695, %v894
    %v1032 = vmul.f32 %v696, %v899
    %v1033 = vmul.f32 %v697, %v904
    %v1034 = vmul.f32 %v698, %v909
    %v1035 = vmul.f32 %v699, %v914
    %v1036 = vmul.f32 %v700, %v919
    %v1037 = vmul.f32 %v701, %v924
    %v1038 = vmul.f32 %v702, %v929
    %v1039 = vmul.f32 %v703, %v934
    %v1040 = vmul.f32 %v704, %v939
    %v1041 = vmul.f32 %v705, %v944
    %v1042 = vmul.f32 %v706, %v949
    %v1043 = vmul.f32 %v707, %v954
    %v1044 = vmul.f32 %v708, %v959
    %v1045 = vmul.f32 %v709, %v964
    %v1046 = vmul.f32 %v710, %v969
    %v1047 = vmul.f32 %v711, %v974
    %v1048 = vmul.f32 %v712, %v979
    %v1049 = vmul.f32 %v713, %v984
    %v1050 = vmul.f32 %v714, %v989
    %v1051 = vmul.f32 %v715, %v994
    %v1052 = vmul.f32 %v716, %v999
    %v1053 = vmul.f32 %v717, %v1004
    %v1054 = vadd.f32 %v1006, %v1007
    %v1055 = vadd.f32 %v1054, %v1008
    %v1056 = vadd.f32 %v1055, %v1009
    %v1057 = vadd.f32 %v1056, %v1010
    %v1058 = vadd.f32 %v1057, %v1011
    %v1059 = vadd.f32 %v1058, %v1012
    %v1060 = vadd.f32 %v1059, %v1013
    %v1061 = vadd.f32 %v1060, %v1014
    %v1062 = vadd.f32 %v1061, %v1015
    %v1063 = vadd.f32 %v1062, %v1016
    %v1064 = vadd.f32 %v1063, %v1017
    %v1065 = vadd.f32 %v1064, %v1018
    %v1066 = vadd.f32 %v1065, %v1019
    %v1067 = vadd.f32 %v1066, %v1020
    %v1068 = vadd.f32 %v1067, %v1021
    %v1069 = vadd.f32 %v1068, %v1022
    %v1070 = vadd.f32 %v1069, %v1023
    %v1071 = vadd.f32 %v1070, %v1024
    %v1072 = vadd.f32 %v1071, %v1025
    %v1073 = vadd.f32 %v1072, %v1026
    %v1074 = vadd.f32 %v1073, %v1027
    %v1075 = vadd.f32 %v1074, %v1028
    %v1076 = vadd.f32 %v1075, %v1029
    %v1077 = vadd.f32 %v1076, %v1030
    %v1078 = vadd.f32 %v1077, %v1031
    %v1079 = vadd.f32 %v1078, %v1032
    %v1080 = vadd.f32 %v1079, %v1033
    %v1081 = vadd.f32 %v1080, %v1034
    %v1082 = vadd.f32 %v1081, %v1035
    %v1083 = vadd.f32 %v1082, %v1036
    %v1084 = vadd.f32 %v1083, %v1037
    %v1085 = vadd.f32 %v1084, %v1038
    %v1086 = vadd.f32 %v1085, %v1039
    %v1087 = vadd.f32 %v1086, %v1040
    %v1088 = vadd.f32 %v1087, %v1041
    %v1089 = vadd.f32 %v1088, %v1042
    %v1090 = vadd.f32 %v1089, %v1043
    %v1091 = vadd.f32 %v1090, %v1044
    %v1092 = vadd.f32 %v1091, %v1045
    %v1093 = vadd.f32 %v1092, %v1046
    %v1094 = vadd.f32 %v1093, %v1047
    %v1095 = vadd.f32 %v1094, %v1048
    %v1096 = vadd.f32 %v1095, %v1049
    %v1097 = vadd.f32 %v1096, %v1050
    %v1098 = vadd.f32 %v1097, %v1051
    %v1099 = vadd.f32 %v1098, %v1052
    %v1100 = vadd.f32 %v1099, %v1053
    %v1101 = vrot.slane %v1100, 4
    %v1102 = vadd.f32 %v1100, %v1101
    %v1103 = vrot.slane %v1102, 2
    %v1104 = vadd.f32 %v1102, %v1103
    %v1105 = vrot.slane %v1104, 1
    %v1106 = vadd.f32 %v1104, %v1105
    %s1107 = sld [smem:[#allocation2]]
    %v1108 = vstv %s1107
    %v1109 = vadd.f32 %v1106, %v1108
    %1110 = vst [vmem:[#allocation3] sm:$0x1] %v1109
    // Predicated region
    $region22: #{tpu_custom_call.1} parent=1 // pred_check
      _
    $region23: #{tpu_custom_call.1} parent=1 // pred_check_branch
      %1112 = sbr.rel (0) target = $region25
    $region24: #{tpu_custom_call.1} parent=1 // pred_region
      %1114 = vsyncadd [#allocation4], 0
      %s1116 = sshll.u32 [#allocation3], 4
      %s1117 = int_to_ptr.vmem [resolvable:$true] %s1116
      %s1118 = sshll.u32 %s5, 4
      %s1119 = int_to_ptr.hbm [resolvable:$true] %s1118
      %1121 = dma.vmem_to_hbm [thread:$0]  %s1117, 16, %s1119, [#allocation4]
    $region25: #{tpu_custom_call.1} parent=1 // pred_fallthru
      _
    // Predicated region
    $region26: #{tpu_custom_call.1} parent=1 // pred_check
      _
    $region27: #{tpu_custom_call.1} parent=1 // pred_check_branch
      %1123 = sbr.rel (0) target = $region29
    $region28: #{tpu_custom_call.1} parent=1 // pred_region
      %1125 = dma.done [#allocation4], 16
    $region29: #{tpu_custom_call.1} parent=1 // pred_fallthru
      _
    %1126 = vsyncpa [#allocation4], 1

</llo_original>
